<compile_context>
chip_gen: v7x
topology: tpu7x:2x2x1
jax: 0.10.0
libtpu: 0.0.40
codegen_flags: <defaults>
</compile_context>

<pallas_src>
import jax
import jax.numpy as jnp
from jax.experimental import pallas as pl
from jax.experimental.pallas import tpu as pltpu

# Problem sizes implied by the module's forward.
N, CIN, H, W = 2, 4, 16, 16
COUT = 8
KH = KW = 3
POOL = 2
HP, WP = H // POOL, W // POOL
FEAT = COUT * HP * WP          # 512 (PyTorch Flatten of the NCHW pooled map)
NOUT = 10

IN_LANES = CIN * W             # 64   conv-input lanes:  lane = ci*W + w
OUT_LANES = W * COUT           # 128  conv-output lanes: lane = w*COUT + co
K_CONV = KH * IN_LANES         # 192  conv contraction (kh folded into K)
ROWS = N * H                   # 32   batch stacked along sublanes


def prepare_params(conv_w, conv_b, fc_w, fc_b):
    """One-time, weight-side preprocessing (off the per-call critical path)."""
    f32 = jnp.float32
    conv_w = conv_w.astype(f32)
    fc_w = fc_w.astype(f32)

    # (1) Banded conv weights, kh folded into the contraction dim:
    #     bandf[kh*64 + ci*16 + u, w*8 + co] = conv_w[co, ci, kh, kw],  u = w + kw - 1
    #     (only valid taps -> the W zero-padding becomes structural zeros).
    shift = jnp.stack([jnp.eye(W, k=1 - kw, dtype=f32) for kw in range(KW)])   # (KW, W, W)
    band = jnp.einsum("ocsk,kuw->scuwo", conv_w, shift)                        # (KH,CIN,W,W,COUT)
    bandf = band.reshape(K_CONV, OUT_LANES)                                    # (192, 128)

    # (2) Block-diagonal FC weights: 8 per-pooled-row slabs lane-concatenated,
    #     each padded 10 -> 16 lanes; rows only at the valid pooled lanes
    #     (l = 16*wp + co), zeros elsewhere (kills W-pool garbage lanes).
    fc4 = fc_w.reshape(NOUT, COUT, HP, WP)                                     # [o, co, hp, wp]
    g = jnp.transpose(fc4, (3, 1, 2, 0))                                       # (wp, co, hp, o)
    g = jnp.pad(g, ((0, 0), (0, 16 - COUT), (0, 0), (0, 16 - NOUT)))           # (8,16,8,16)
    gcat = g.reshape(OUT_LANES, OUT_LANES)                                     # (128, 128)

    # (3) Row/group selection mask: keep row r only against its own pooled-row
    #     weight slab, i.e. (r % 16) == 2*hp. Also kills H-pool odd-row garbage.
    r = jnp.arange(ROWS, dtype=jnp.int32)[:, None]
    hp_of_c = (jnp.arange(OUT_LANES, dtype=jnp.int32) // 16)[None, :]
    mask = ((r % H) == 2 * hp_of_c).astype(f32)                                # (32, 128)

    # (4) Bias: FC bias + folded conv bias (per-co bias is constant within each
    #     2x2 pool window, so it commutes with both maxes), padded to 128 lanes.
    fcb = fc_b.astype(f32) + jnp.einsum("c,ochw->o", conv_b.astype(f32), fc4)
    fcb_row = jnp.pad(fcb, (0, OUT_LANES - NOUT)).reshape(1, OUT_LANES)        # (1, 128)

    return bandf, gcat, mask, fcb_row


def fused_kernel(x_ref, band_ref, gcat_ref, mask_ref, fcb_ref, o_ref):
    # x_ref   : (32, 192)  pre-padded, lane-packed, kh-shifted input (both samples)
    # band_ref: (192, 128) banded conv weights (kh folded into K)
    # gcat_ref: (128, 128) block-diagonal FC weights
    # mask_ref: (32, 128)  0/1 row/group selection mask
    # fcb_ref : (1, 128)   FC bias (+ folded conv bias), lane-padded
    # o_ref   : (2, 128)   lane-dense output slab (lanes >= 10 are garbage)

    # Conv2d(4->8, 3x3, pad 1): one MXU matmul, K = 192.
    y = jnp.dot(x_ref[...], band_ref[...],
                preferred_element_type=jnp.float32)                 # (32, 128)

    # MaxPool2d(2), W direction: XLU lane roll (by -COUT) + VPU max.
    # Valid pooled values sit at lanes 16*wp + co.
    wm = jnp.maximum(y, pltpu.roll(y, shift=OUT_LANES - COUT, axis=1))

    # MaxPool2d(2), H direction: XLU sublane roll (by -1) + VPU max.
    # Valid pooled rows are the even rows within each 16-row sample block.
    hm = jnp.maximum(wm, pltpu.roll(wm, shift=ROWS - 1, axis=0))

    # Linear(512 -> 10): block-diagonal matmul -> mask -> per-sample sublane
    # reduce -> lane-group fold (3 rolls + adds) -> + bias.
    s = jnp.dot(hm, gcat_ref[...], preferred_element_type=jnp.float32)   # (32, 128)
    masked = s * mask_ref[...]
    spread = jnp.concatenate(
        [jnp.sum(masked[n * H:(n + 1) * H, :], axis=0, keepdims=True)
         for n in range(N)],
        axis=0)                                                          # (2, 128)
    f = spread
    f = f + pltpu.roll(f, shift=OUT_LANES - 64, axis=1)
    f = f + pltpu.roll(f, shift=OUT_LANES - 32, axis=1)
    f = f + pltpu.roll(f, shift=OUT_LANES - 16, axis=1)
    o_ref[...] = f + fcb_ref[...]


def output_forward(x, bandf, gcat, mask, fcb_row):
    """Fused Pallas forward: Conv2d -> MaxPool2d -> Flatten -> Linear."""
    # Wrapper-side layout plumbing (cheap XLA ops, keeps the kernel lane-dense):
    # NCHW -> zero H-pad -> lane pack (ci,w) -> kh-shifted lane concat -> stack batch.
    xpad = jnp.pad(x.astype(jnp.float32), ((0, 0), (0, 0), (1, 1), (0, 0)))   # (N,CIN,H+2,W)
    xl = jnp.transpose(xpad, (0, 2, 1, 3)).reshape(N, H + 2, IN_LANES)        # lane = ci*W + w
    xs = jnp.concatenate([xl[:, kh:kh + H, :] for kh in range(KH)], axis=-1)  # (N,H,192)
    xs = xs.reshape(ROWS, K_CONV)                                             # (32, 192)

    out_pad = pl.pallas_call(
        fused_kernel,
        out_shape=jax.ShapeDtypeStruct((N, OUT_LANES), jnp.float32),
        grid_spec=pltpu.PrefetchScalarGridSpec(
            num_scalar_prefetch=0,
            grid=(1,),
            in_specs=[
                pl.BlockSpec((ROWS, K_CONV), lambda i: (0, 0)),
                pl.BlockSpec((K_CONV, OUT_LANES), lambda i: (0, 0)),
                pl.BlockSpec((OUT_LANES, OUT_LANES), lambda i: (0, 0)),
                pl.BlockSpec((ROWS, OUT_LANES), lambda i: (0, 0)),
                pl.BlockSpec((1, OUT_LANES), lambda i: (0, 0)),
            ],
            out_specs=pl.BlockSpec((N, OUT_LANES), lambda i: (0, 0)),
        ),
        compiler_params=pltpu.CompilerParams(
            dimension_semantics=("arbitrary",)),
    )(xs, bandf, gcat, mask, fcb_row)
    return out_pad[:, :NOUT]


def output_forward_ref(x_nchw, conv_w, conv_b, fc_w, fc_b):
    """Pure-JAX reference mirroring the PyTorch forward exactly."""
    y = jax.lax.conv_general_dilated(
        x_nchw, conv_w, window_strides=(1, 1), padding=((1, 1), (1, 1)),
        dimension_numbers=("NCHW", "OIHW", "NCHW"))
    y = y + conv_b.reshape(1, COUT, 1, 1)
    y = jax.lax.reduce_window(y, -jnp.inf, jax.lax.max,
                              (1, 1, POOL, POOL), (1, 1, POOL, POOL), "VALID")
    y = y.reshape(N, FEAT)
    return y @ fc_w.T + fc_b


if __name__ == "__main__":
    key = jax.random.PRNGKey(0)
    kx, kcw, kcb, kfw, kfb = jax.random.split(key, 5)

    # Deterministic synthetic inputs / parameters (shapes match the module).
    x = jax.random.normal(kx, (N, CIN, H, W), jnp.float32)
    conv_w = jax.random.normal(kcw, (COUT, CIN, KH, KW), jnp.float32) * 0.1
    conv_b = jax.random.normal(kcb, (COUT,), jnp.float32) * 0.1
    fc_w = jax.random.normal(kfw, (NOUT, FEAT), jnp.float32) * 0.05
    fc_b = jax.random.normal(kfb, (NOUT,), jnp.float32) * 0.05

    # One-time weight-side prep (band matrices, block-diag FC weights, mask, bias).
    # NOTE: garbage lanes/rows are killed by zero weights / the mask; with
    # NaN/Inf inputs 0*NaN would leak — fine for finite inputs (same as before).
    bandf, gcat, mask, fcb_row = prepare_params(conv_w, conv_b, fc_w, fc_b)

    fwd = jax.jit(output_forward)
    out = jax.block_until_ready(fwd(x, bandf, gcat, mask, fcb_row))

    ref = output_forward_ref(x, conv_w, conv_b, fc_w, fc_b)
    assert out.shape == (N, NOUT)
    err = float(jnp.max(jnp.abs(out - ref)))
    assert jnp.allclose(out, ref, atol=1e-3, rtol=1e-3), f"max abs err = {err}"

    print("KERNEL_OK")
</pallas_src>

<mosaic_0001>
module attributes {stable_mosaic.version = 11 : i64} {
  func.func @fused_kernel(%arg0: i32, %arg1: memref<32x192xf32, #tpu.memory_space<vmem>>, %arg2: memref<192x128xf32, #tpu.memory_space<vmem>>, %arg3: memref<128x128xf32, #tpu.memory_space<vmem>>, %arg4: memref<32x128xf32, #tpu.memory_space<vmem>>, %arg5: memref<1x128xf32, #tpu.memory_space<vmem>>, %arg6: memref<2x128xf32, #tpu.memory_space<vmem>>) attributes {dimension_semantics = [#tpu.dimension_semantics<arbitrary>], iteration_bounds = array<i64: 1>, scalar_prefetch = 0 : i64, scratch_operands = 0 : i64, tpu.core_type = #tpu.core_type<tc>, window_params = [{pipeline_mode = #tpu.pipeline_mode<synchronous>, transform_indices = @transform_0, window_bounds = array<i64: 32, 192>}, {pipeline_mode = #tpu.pipeline_mode<synchronous>, transform_indices = @transform_1, window_bounds = array<i64: 192, 128>}, {pipeline_mode = #tpu.pipeline_mode<synchronous>, transform_indices = @transform_2, window_bounds = array<i64: 128, 128>}, {pipeline_mode = #tpu.pipeline_mode<synchronous>, transform_indices = @transform_3, window_bounds = array<i64: 32, 128>}, {pipeline_mode = #tpu.pipeline_mode<synchronous>, transform_indices = @transform_4, window_bounds = array<i64: 1, 128>}, {pipeline_mode = #tpu.pipeline_mode<synchronous>, transform_indices = @transform_5, window_bounds = array<i64: 2, 128>}]} {
    %c0 = arith.constant 0 : index
    %c0_0 = arith.constant 0 : index
    %0 = vector.load %arg1[%c0, %c0_0] : memref<32x192xf32, #tpu.memory_space<vmem>>, vector<32x192xf32>
    %c0_1 = arith.constant 0 : index
    %c0_2 = arith.constant 0 : index
    %1 = vector.load %arg2[%c0_1, %c0_2] : memref<192x128xf32, #tpu.memory_space<vmem>>, vector<192x128xf32>
    %cst = arith.constant dense<0.000000e+00> : vector<32x128xf32>
    %2 = tpu.matmul %0, %1, %cst {dimension_numbers = #tpu.dot_dimension_numbers<[1], [0], [0], [1], [0, 0, 1, 1], [], []>} : vector<32x192xf32>, vector<192x128xf32>, vector<32x128xf32> -> vector<32x128xf32>
    %c120_i32 = arith.constant 120 : i32
    %3 = tpu.dynamic_rotate %2 by %c120_i32 dim 1 : vector<32x128xf32>, i32 -> vector<32x128xf32>
    %4 = arith.maximumf %2, %3 : vector<32x128xf32>
    %c31_i32 = arith.constant 31 : i32
    %5 = tpu.dynamic_rotate %4 by %c31_i32 dim 0 : vector<32x128xf32>, i32 -> vector<32x128xf32>
    %6 = arith.maximumf %4, %5 : vector<32x128xf32>
    %c0_3 = arith.constant 0 : index
    %c0_4 = arith.constant 0 : index
    %7 = vector.load %arg3[%c0_3, %c0_4] : memref<128x128xf32, #tpu.memory_space<vmem>>, vector<128x128xf32>
    %cst_5 = arith.constant dense<0.000000e+00> : vector<32x128xf32>
    %8 = tpu.matmul %6, %7, %cst_5 {dimension_numbers = #tpu.dot_dimension_numbers<[1], [0], [0], [1], [0, 0, 1, 1], [], []>} : vector<32x128xf32>, vector<128x128xf32>, vector<32x128xf32> -> vector<32x128xf32>
    %c0_6 = arith.constant 0 : index
    %c0_7 = arith.constant 0 : index
    %9 = vector.load %arg4[%c0_6, %c0_7] : memref<32x128xf32, #tpu.memory_space<vmem>>, vector<32x128xf32>
    %10 = arith.mulf %8, %9 : vector<32x128xf32>
    %11 = vector.extract_strided_slice %10 {offsets = [0, 0], sizes = [16, 128], strides = [1, 1]} : vector<32x128xf32> to vector<16x128xf32>
    %cst_8 = arith.constant dense<0.000000e+00> : vector<128xf32>
    %12 = vector.multi_reduction <add>, %11, %cst_8 [0] : vector<16x128xf32> to vector<128xf32>
    %13 = vector.shape_cast %12 : vector<128xf32> to vector<1x128xf32>
    %14 = vector.extract_strided_slice %10 {offsets = [16, 0], sizes = [16, 128], strides = [1, 1]} : vector<32x128xf32> to vector<16x128xf32>
    %cst_9 = arith.constant dense<0.000000e+00> : vector<128xf32>
    %15 = vector.multi_reduction <add>, %14, %cst_9 [0] : vector<16x128xf32> to vector<128xf32>
    %16 = vector.shape_cast %15 : vector<128xf32> to vector<1x128xf32>
    %17 = tpu.concatenate %13, %16 in 0 : vector<1x128xf32>, vector<1x128xf32> -> vector<2x128xf32>
    %c64_i32 = arith.constant 64 : i32
    %18 = tpu.dynamic_rotate %17 by %c64_i32 dim 1 : vector<2x128xf32>, i32 -> vector<2x128xf32>
    %19 = arith.addf %17, %18 : vector<2x128xf32>
    %c96_i32 = arith.constant 96 : i32
    %20 = tpu.dynamic_rotate %19 by %c96_i32 dim 1 : vector<2x128xf32>, i32 -> vector<2x128xf32>
    %21 = arith.addf %19, %20 : vector<2x128xf32>
    %c112_i32 = arith.constant 112 : i32
    %22 = tpu.dynamic_rotate %21 by %c112_i32 dim 1 : vector<2x128xf32>, i32 -> vector<2x128xf32>
    %23 = arith.addf %21, %22 : vector<2x128xf32>
    %c0_10 = arith.constant 0 : index
    %c0_11 = arith.constant 0 : index
    %24 = vector.load %arg5[%c0_10, %c0_11] : memref<1x128xf32, #tpu.memory_space<vmem>>, vector<1x128xf32>
    %25 = vector.broadcast %24 : vector<1x128xf32> to vector<2x128xf32>
    %26 = arith.addf %23, %25 : vector<2x128xf32>
    %c0_12 = arith.constant 0 : index
    %c0_13 = arith.constant 0 : index
    %27 = vector.load %arg6[%c0_12, %c0_13] : memref<2x128xf32, #tpu.memory_space<vmem>>, vector<2x128xf32>
    tpu.vector_store %arg6[%c0_12, %c0_13], %26 {strides = array<i32>} : memref<2x128xf32, #tpu.memory_space<vmem>>, vector<2x128xf32>,
    return
  }
  func.func @transform_0(%arg0: i32) -> (i32, i32) {
    %c0_i32 = arith.constant 0 : i32
    %c0_i32_0 = arith.constant 0 : i32
    %c0_i32_1 = arith.constant 0 : i32
    return %c0_i32, %c0_i32_0 : i32, i32
  }
  func.func @transform_1(%arg0: i32) -> (i32, i32) {
    %c0_i32 = arith.constant 0 : i32
    %c0_i32_0 = arith.constant 0 : i32
    %c0_i32_1 = arith.constant 0 : i32
    return %c0_i32, %c0_i32_0 : i32, i32
  }
  func.func @transform_2(%arg0: i32) -> (i32, i32) {
    %c0_i32 = arith.constant 0 : i32
    %c0_i32_0 = arith.constant 0 : i32
    %c0_i32_1 = arith.constant 0 : i32
    return %c0_i32, %c0_i32_0 : i32, i32
  }
  func.func @transform_3(%arg0: i32) -> (i32, i32) {
    %c0_i32 = arith.constant 0 : i32
    %c0_i32_0 = arith.constant 0 : i32
    %c0_i32_1 = arith.constant 0 : i32
    return %c0_i32, %c0_i32_0 : i32, i32
  }
  func.func @transform_4(%arg0: i32) -> (i32, i32) {
    %c0_i32 = arith.constant 0 : i32
    %c0_i32_0 = arith.constant 0 : i32
    %c0_i32_1 = arith.constant 0 : i32
    return %c0_i32, %c0_i32_0 : i32, i32
  }
  func.func @transform_5(%arg0: i32) -> (i32, i32) {
    %c0_i32 = arith.constant 0 : i32
    %c0_i32_0 = arith.constant 0 : i32
    %c0_i32_1 = arith.constant 0 : i32
    return %c0_i32, %c0_i32_0 : i32, i32
  }
}

</mosaic_0001>

<llo_original>
// kernel: output_forward.1
$region0: #{output_forward.1}
  #allocation0 [shape = 'u32[]', space=smem, size = 0x4, offset = 0x4, fixed_abs, tag = 'smem constant byte address 0x4 - core index']
  #allocation1 [shape = 'u32[144,128]{1,0:T(1,128)}', space=vmem, size = 0x12000, scoped, tag = 'internal scratch']
  %s0 = inlined_call_operand.vmem [shape: f32[32,192], index: 0, kind: input, shape index: {}]
  %s1 = inlined_call_operand.vmem [shape: f32[192,128], index: 1, kind: input, shape index: {}]
  %s2 = inlined_call_operand.vmem [shape: f32[128,128], index: 2, kind: input, shape index: {}]
  %s3 = inlined_call_operand.vmem [shape: f32[32,128], index: 3, kind: input, shape index: {}]
  %s4 = inlined_call_operand.vmem [shape: f32[1,128], index: 4, kind: input, shape index: {}]
  %s5 = inlined_call_operand.hbm [shape: f32[2,128], index: 5, kind: output, shape index: {}]
  %s6 = sld [smem:[#allocation0]]
  $region30: #{output_forward.1} parent=0
    _
  %s8 = ssub.s32 1, %s6
  %s9 = scalar_select 0, %s8, %s6
  $region1: #{output_forward.1} parent=0
    #allocation2 [shape = 'u8[1024]{0}', space=vmem, size = 0x400, scoped, tag = 'output window, operand 0, single buffered']
    #allocation3 [shape = 's32[1]{0}', space=sflag, size = 0x4, scoped, tag = 'scoped memory for output_forward.1']
    %10 = vsyncpa [#allocation3], 0
    // Predicated region
    $region2: #{output_forward.1} parent=1 // pred_check
      _
    $region3: #{output_forward.1} parent=1 // pred_check_branch
      %12 = sbr.rel (0) target = $region5
    $region4: #{output_forward.1} parent=1 // pred_region
      _
    $region5: #{output_forward.1} parent=1 // pred_fallthru
      _
    // Predicated region
    $region6: #{output_forward.1} parent=1 // pred_check
      _
    $region7: #{output_forward.1} parent=1 // pred_check_branch
      %14 = sbr.rel (0) target = $region9
    $region8: #{output_forward.1} parent=1 // pred_region
      _
    $region9: #{output_forward.1} parent=1 // pred_fallthru
      _
    // Predicated region
    $region10: #{output_forward.1} parent=1 // pred_check
      _
    $region11: #{output_forward.1} parent=1 // pred_check_branch
      %16 = sbr.rel (0) target = $region13
    $region12: #{output_forward.1} parent=1 // pred_region
      _
    $region13: #{output_forward.1} parent=1 // pred_fallthru
      _
    // Predicated region
    $region14: #{output_forward.1} parent=1 // pred_check
      _
    $region15: #{output_forward.1} parent=1 // pred_check_branch
      %18 = sbr.rel (0) target = $region17
    $region16: #{output_forward.1} parent=1 // pred_region
      _
    $region17: #{output_forward.1} parent=1 // pred_fallthru
      _
    // Predicated region
    $region18: #{output_forward.1} parent=1 // pred_check
      _
    $region19: #{output_forward.1} parent=1 // pred_check_branch
      %20 = sbr.rel (0) target = $region21
    $region20: #{output_forward.1} parent=1 // pred_region
      _
    $region21: #{output_forward.1} parent=1 // pred_fallthru
      _
    %v21 = vld [vmem:[%s0] sm:$0xff]
    %v22 = vld [vmem:[%s0 + $0x8] sm:$0xff]
    %v23 = vld [vmem:[%s0 + $0x10] sm:$0xff]
    %v24 = vld [vmem:[%s0 + $0x18] sm:$0xff]
    %v25 = vld [vmem:[%s0 + $0x20] sm:$0xff]
    %v26 = vld [vmem:[%s0 + $0x28] sm:$0xff]
    %v27 = vld [vmem:[%s0 + $0x30] sm:$0xff]
    %v28 = vld [vmem:[%s0 + $0x38] sm:$0xff]
    %v29 = vld [vmem:[%s1] sm:$0xff]
    %v30 = vld [vmem:[%s1 + $0x8] sm:$0xff]
    %v31 = vld [vmem:[%s1 + $0x10] sm:$0xff]
    %v32 = vld [vmem:[%s1 + $0x18] sm:$0xff]
    %v33 = vld [vmem:[%s1 + $0x20] sm:$0xff]
    %v34 = vld [vmem:[%s1 + $0x28] sm:$0xff]
    %v35 = vld [vmem:[%s1 + $0x30] sm:$0xff]
    %v36 = vld [vmem:[%s1 + $0x38] sm:$0xff]
    %v37 = vld [vmem:[%s1 + $0x40] sm:$0xff]
    %v38 = vld [vmem:[%s1 + $0x48] sm:$0xff]
    %v39 = vld [vmem:[%s1 + $0x50] sm:$0xff]
    %v40 = vld [vmem:[%s1 + $0x58] sm:$0xff]
    %v41 = vld [vmem:[%s1 + $0x60] sm:$0xff]
    %v42 = vld [vmem:[%s1 + $0x68] sm:$0xff]
    %v43 = vld [vmem:[%s1 + $0x70] sm:$0xff]
    %v44 = vld [vmem:[%s1 + $0x78] sm:$0xff]
    %v45 = vld [vmem:[%s1 + $0x80] sm:$0xff]
    %v46 = vld [vmem:[%s1 + $0x88] sm:$0xff]
    %v47 = vld [vmem:[%s1 + $0x90] sm:$0xff]
    %v48 = vld [vmem:[%s1 + $0x98] sm:$0xff]
    %v49 = vld [vmem:[%s1 + $0xa0] sm:$0xff]
    %v50 = vld [vmem:[%s1 + $0xa8] sm:$0xff]
    %v51 = vld [vmem:[%s1 + $0xb0] sm:$0xff]
    %v52 = vld [vmem:[%s1 + $0xb8] sm:$0xff]
    %vm53 = vcmask 523264
    %v55 = vsel %vm53, %v22, 0
    %v58 = vsel %vm53, %v24, 0
    %v61 = vsel %vm53, %v26, 0
    %v64 = vsel %vm53, %v28, 0
    %66 = vmatprep.subr.mxu0 0.0
    %67 = vmatpush1.msra.mxu0 %v29
    %68 = vmatprep.subr.mxu0 0.0
    %69 = vmatpush1.msra.mxu0 %v30
    %70 = vmatprep.subr.mxu0 0.0
    %71 = vmatpush1.msra.mxu0 %v31
    %72 = vmatprep.subr.mxu0 0.0
    %73 = vmatpush1.msra.mxu0 %v32
    %74 = vmatprep.subr.mxu0 0.0
    %75 = vmatpush1.msra.mxu0 %v33
    %76 = vmatprep.subr.mxu0 0.0
    %77 = vmatpush1.msra.mxu0 %v34
    %78 = vmatprep.subr.mxu0 0.0
    %79 = vmatpush1.msra.mxu0 %v35
    %80 = vmatprep.subr.mxu0 0.0
    %81 = vmatpush1.msra.mxu0 %v36
    %82 = vmatprep.subr.mxu0 0.0
    %83 = vmatpush1.msra.mxu0 %v37
    %84 = vmatprep.subr.mxu0 0.0
    %85 = vmatpush1.msra.mxu0 %v38
    %86 = vmatprep.subr.mxu0 0.0
    %87 = vmatpush1.msra.mxu0 %v39
    %88 = vmatprep.subr.mxu0 0.0
    %89 = vmatpush1.msra.mxu0 %v40
    %90 = vmatprep.subr.mxu0 0.0
    %91 = vmatpush1.msra.mxu0 %v41
    %92 = vmatprep.subr.mxu0 0.0
    %93 = vmatpush1.msra.mxu0 %v42
    %94 = vmatprep.subr.mxu0 0.0
    %95 = vmatpush1.msra.mxu0 %v43
    %96 = vmatprep.subr.mxu0 0.0
    %97 = vmatpush1.msra.mxu0 %v44
    %98 = vmatprep.subr.mxu0 0.0
    %99 = vmatpush1.msra.mxu0 %v45
    %100 = vmatprep.subr.mxu0 0.0
    %101 = vmatpush1.msra.mxu0 %v46
    %102 = vmatprep.subr.mxu0 0.0
    %103 = vmatpush1.msra.mxu0 %v47
    %104 = vmatprep.subr.mxu0 0.0
    %105 = vmatpush1.msra.mxu0 %v48
    %106 = vmatprep.subr.mxu0 0.0
    %107 = vmatpush1.msra.mxu0 %v49
    %108 = vmatprep.subr.mxu0 0.0
    %109 = vmatpush1.msra.mxu0 %v50
    %110 = vmatprep.subr.mxu0 0.0
    %111 = vmatpush1.msra.mxu0 %v51
    %112 = vmatprep.subr.mxu0 0.0
    %113 = vmatpush1.msra.mxu0 %v52
    %114 = vmatprep.subr.mxu0 0.0
    %115 = vmatpush1.msra.mxu0 0.0
    %116 = vmatprep.subr.mxu0 0.0
    %117 = vmatpush1.msra.mxu0 0.0
    %118 = vmatprep.subr.mxu0 0.0
    %119 = vmatpush1.msra.mxu0 0.0
    %120 = vmatprep.subr.mxu0 0.0
    %121 = vmatpush1.msra.mxu0 0.0
    %122 = vmatprep.subr.mxu0 0.0
    %123 = vmatpush1.msra.mxu0 0.0
    %124 = vmatprep.subr.mxu0 0.0
    %125 = vmatpush1.msra.mxu0 0.0
    %126 = vmatprep.subr.mxu0 0.0
    %127 = vmatpush1.msra.mxu0 0.0
    %128 = vmatprep.subr.mxu0 0.0
    %129 = vmatpush1.msra.mxu0 0.0
    %130 = vmatprep.mubr.f32.mxu0 %v55
    %131 = vmatmul.mubr.f32.gmra.mrb[0].mxu0 %v21
    %v132 = vpop.f32.mrb[0].mxu0
    %v133 = vadd.f32 0.0, %v132
    %v134 = vpop.f32.mrb[0].mxu0
    %135 = vmatprep.mubr.f32.mxu0 %v58
    %136 = vmatmul.mubr.f32.gmra.mrb[0].mxu0 %v23
    %v137 = vpop.f32.mrb[0].mxu0
    %v138 = vadd.f32 0.0, %v137
    %v139 = vpop.f32.mrb[0].mxu0
    %140 = vmatprep.mubr.f32.mxu0 %v61
    %141 = vmatmul.mubr.f32.gmra.mrb[0].mxu0 %v25
    %v142 = vpop.f32.mrb[0].mxu0
    %v143 = vadd.f32 0.0, %v142
    %v144 = vpop.f32.mrb[0].mxu0
    %145 = vmatprep.mubr.f32.mxu0 %v64
    %146 = vmatmul.mubr.f32.gmra.mrb[0].mxu0 %v27
    %v147 = vpop.f32.mrb[0].mxu0
    %v148 = vadd.f32 0.0, %v147
    %v149 = vpop.f32.mrb[0].mxu0
    %150 = vdwg.mxu0
    %151 = vrot.lane.b32.xlu0 %v133, 120
    %v152 = vpop.permute.xlu0 %151
    %153 = vrot.lane.b32.xlu0 %v138, 120
    %v154 = vpop.permute.xlu0 %153
    %155 = vrot.lane.b32.xlu0 %v143, 120
    %v156 = vpop.permute.xlu0 %155
    %157 = vrot.lane.b32.xlu0 %v148, 120
    %v158 = vpop.permute.xlu0 %157
    %v159 = vmax.f32 %v133, %v152
    %v160 = vmax.f32 %v138, %v154
    %v161 = vmax.f32 %v143, %v156
    %v162 = vmax.f32 %v148, %v158
    %v163 = vrot.slane %v159, 1
    %v164 = vrot.slane %v160, 1
    %v165 = vrot.slane %v161, 1
    %v166 = vrot.slane %v162, 1
    %v167 = vlaneseq
    %v168 = vshrl.u32 %v167, 7
    %vm169 = vcmp.lt.s32.totalorder %v168, 7
    %v170 = vsel %vm169, %v165, %v166
    %v171 = vsel %vm169, %v164, %v165
    %v172 = vsel %vm169, %v163, %v164
    %v173 = vsel %vm169, %v166, %v163
    %v174 = vmax.f32 %v159, %v172
    %v175 = vmax.f32 %v160, %v171
    %v176 = vmax.f32 %v161, %v170
    %v177 = vmax.f32 %v162, %v173
    %v178 = vld [vmem:[%s2] sm:$0xff]
    %v179 = vld [vmem:[%s2 + $0x8] sm:$0xff]
    %v180 = vld [vmem:[%s2 + $0x10] sm:$0xff]
    %v181 = vld [vmem:[%s2 + $0x18] sm:$0xff]
    %v182 = vld [vmem:[%s2 + $0x20] sm:$0xff]
    %v183 = vld [vmem:[%s2 + $0x28] sm:$0xff]
    %v184 = vld [vmem:[%s2 + $0x30] sm:$0xff]
    %v185 = vld [vmem:[%s2 + $0x38] sm:$0xff]
    %v186 = vld [vmem:[%s2 + $0x40] sm:$0xff]
    %v187 = vld [vmem:[%s2 + $0x48] sm:$0xff]
    %v188 = vld [vmem:[%s2 + $0x50] sm:$0xff]
    %v189 = vld [vmem:[%s2 + $0x58] sm:$0xff]
    %v190 = vld [vmem:[%s2 + $0x60] sm:$0xff]
    %v191 = vld [vmem:[%s2 + $0x68] sm:$0xff]
    %v192 = vld [vmem:[%s2 + $0x70] sm:$0xff]
    %v193 = vld [vmem:[%s2 + $0x78] sm:$0xff]
    %194 = vmatprep.subr.mxu0 0.0
    %195 = vmatpush1.msra.mxu0 %v178
    %196 = vmatprep.subr.mxu0 0.0
    %197 = vmatpush1.msra.mxu0 %v179
    %198 = vmatprep.subr.mxu0 0.0
    %199 = vmatpush1.msra.mxu0 %v180
    %200 = vmatprep.subr.mxu0 0.0
    %201 = vmatpush1.msra.mxu0 %v181
    %202 = vmatprep.subr.mxu0 0.0
    %203 = vmatpush1.msra.mxu0 %v182
    %204 = vmatprep.subr.mxu0 0.0
    %205 = vmatpush1.msra.mxu0 %v183
    %206 = vmatprep.subr.mxu0 0.0
    %207 = vmatpush1.msra.mxu0 %v184
    %208 = vmatprep.subr.mxu0 0.0
    %209 = vmatpush1.msra.mxu0 %v185
    %210 = vmatprep.subr.mxu0 0.0
    %211 = vmatpush1.msra.mxu0 %v186
    %212 = vmatprep.subr.mxu0 0.0
    %213 = vmatpush1.msra.mxu0 %v187
    %214 = vmatprep.subr.mxu0 0.0
    %215 = vmatpush1.msra.mxu0 %v188
    %216 = vmatprep.subr.mxu0 0.0
    %217 = vmatpush1.msra.mxu0 %v189
    %218 = vmatprep.subr.mxu0 0.0
    %219 = vmatpush1.msra.mxu0 %v190
    %220 = vmatprep.subr.mxu0 0.0
    %221 = vmatpush1.msra.mxu0 %v191
    %222 = vmatprep.subr.mxu0 0.0
    %223 = vmatpush1.msra.mxu0 %v192
    %224 = vmatprep.subr.mxu0 0.0
    %225 = vmatpush1.msra.mxu0 %v193
    %226 = vmatprep.subr.mxu0 0.0
    %227 = vmatpush1.msra.mxu0 0.0
    %228 = vmatprep.subr.mxu0 0.0
    %229 = vmatpush1.msra.mxu0 0.0
    %230 = vmatprep.subr.mxu0 0.0
    %231 = vmatpush1.msra.mxu0 0.0
    %232 = vmatprep.subr.mxu0 0.0
    %233 = vmatpush1.msra.mxu0 0.0
    %234 = vmatprep.subr.mxu0 0.0
    %235 = vmatpush1.msra.mxu0 0.0
    %236 = vmatprep.subr.mxu0 0.0
    %237 = vmatpush1.msra.mxu0 0.0
    %238 = vmatprep.subr.mxu0 0.0
    %239 = vmatpush1.msra.mxu0 0.0
    %240 = vmatprep.subr.mxu0 0.0
    %241 = vmatpush1.msra.mxu0 0.0
    %242 = vmatprep.subr.mxu0 0.0
    %243 = vmatpush1.msra.mxu0 0.0
    %244 = vmatprep.subr.mxu0 0.0
    %245 = vmatpush1.msra.mxu0 0.0
    %246 = vmatprep.subr.mxu0 0.0
    %247 = vmatpush1.msra.mxu0 0.0
    %248 = vmatprep.subr.mxu0 0.0
    %249 = vmatpush1.msra.mxu0 0.0
    %250 = vmatprep.subr.mxu0 0.0
    %251 = vmatpush1.msra.mxu0 0.0
    %252 = vmatprep.subr.mxu0 0.0
    %253 = vmatpush1.msra.mxu0 0.0
    %254 = vmatprep.subr.mxu0 0.0
    %255 = vmatpush1.msra.mxu0 0.0
    %256 = vmatprep.subr.mxu0 0.0
    %257 = vmatpush1.msra.mxu0 0.0
    %258 = vmatprep.mubr.f32.mxu0 0.0
    %259 = vmatmul.mubr.f32.gmra.mrb[0].mxu0 %v174
    %v260 = vpop.f32.mrb[0].mxu0
    %v261 = vadd.f32 0.0, %v260
    %v262 = vpop.f32.mrb[0].mxu0
    %263 = vmatprep.mubr.f32.mxu0 0.0
    %264 = vmatmul.mubr.f32.gmra.mrb[0].mxu0 %v175
    %v265 = vpop.f32.mrb[0].mxu0
    %v266 = vadd.f32 0.0, %v265
    %v267 = vpop.f32.mrb[0].mxu0
    %268 = vmatprep.mubr.f32.mxu0 0.0
    %269 = vmatmul.mubr.f32.gmra.mrb[0].mxu0 %v176
    %v270 = vpop.f32.mrb[0].mxu0
    %v271 = vadd.f32 0.0, %v270
    %v272 = vpop.f32.mrb[0].mxu0
    %273 = vmatprep.mubr.f32.mxu0 0.0
    %274 = vmatmul.mubr.f32.gmra.mrb[0].mxu0 %v177
    %v275 = vpop.f32.mrb[0].mxu0
    %v276 = vadd.f32 0.0, %v275
    %v277 = vpop.f32.mrb[0].mxu0
    %278 = vdwg.mxu0
    %v279 = vld [vmem:[%s3] sm:$0xff]
    %v280 = vld [vmem:[%s3 + $0x8] sm:$0xff]
    %v281 = vld [vmem:[%s3 + $0x10] sm:$0xff]
    %v282 = vld [vmem:[%s3 + $0x18] sm:$0xff]
    %v283 = vmul.f32 %v261, %v279
    %v284 = vmul.f32 %v266, %v280
    %v285 = vmul.f32 %v271, %v281
    %v286 = vmul.f32 %v276, %v282
    %v287 = vadd.f32 %v283, %v284
    %v288 = vrot.slane %v287, 4
    %v289 = vadd.f32 %v287, %v288
    %v290 = vrot.slane %v289, 2
    %v291 = vadd.f32 %v289, %v290
    %v292 = vrot.slane %v291, 1
    %v293 = vadd.f32 %v291, %v292
    %v294 = vadd.f32 %v285, %v286
    %v295 = vrot.slane %v294, 4
    %v296 = vadd.f32 %v294, %v295
    %v297 = vrot.slane %v296, 2
    %v298 = vadd.f32 %v296, %v297
    %v299 = vrot.slane %v298, 1
    %v300 = vadd.f32 %v298, %v299
    %vm301 = vcmask 1040384
    %v302 = vsel %vm301, %v293, %v300
    %303 = vrot.lane.b32.xlu0 %v302, 64
    %v304 = vpop.permute.xlu0 %303
    %v305 = vadd.f32 %v302, %v304
    %306 = vrot.lane.b32.xlu0 %v305, 96
    %v307 = vpop.permute.xlu0 %306
    %v308 = vadd.f32 %v305, %v307
    %309 = vrot.lane.b32.xlu0 %v308, 112
    %v310 = vpop.permute.xlu0 %309
    %v311 = vadd.f32 %v308, %v310
    %v312 = vld [vmem:[%s4] sm:$0x1]
    %v314 = vlaneseq
    %v315 = vshrl.u32 %v314, 7
    %v316 = vsub.s32 0, %v315
    %v317 = vrot.slane %v312, %v316
    %v319 = vadd.f32 %v311, %v317
    %320 = vst [vmem:[#allocation2] sm:$0x3] %v319
    // Predicated region
    $region22: #{output_forward.1} parent=1 // pred_check
      _
    $region23: #{output_forward.1} parent=1 // pred_check_branch
      %322 = sbr.rel (0) target = $region25
    $region24: #{output_forward.1} parent=1 // pred_region
      %s324 = ssub.s32 32, 32
      %325 = vsyncadd [#allocation3], %s324
      %s327 = sshll.u32 [#allocation2], 4
      %s328 = int_to_ptr.vmem [resolvable:$true] %s327
      %330 = dma.vmem_to_hbm [thread:$0]  %s328, 32, %s5, [#allocation3]
    $region25: #{output_forward.1} parent=1 // pred_fallthru
      _
    // Predicated region
    $region26: #{output_forward.1} parent=1 // pred_check
      _
    $region27: #{output_forward.1} parent=1 // pred_check_branch
      %332 = sbr.rel (0) target = $region29
    $region28: #{output_forward.1} parent=1 // pred_region
      %333 = dma.done [#allocation3], 32
    $region29: #{output_forward.1} parent=1 // pred_fallthru
      _
    %334 = vsyncpa [#allocation3], 1

</llo_original>
